<compile_context>
chip_gen: v7x
topology: tpu7x:2x2x1
jax: 0.10.0
libtpu: 0.0.40
codegen_flags: <defaults>
</compile_context>

<pallas_src>
import functools

import jax
import jax.numpy as jnp
from jax.experimental import pallas as pl
from jax.experimental.pallas import tpu as pltpu


def _fnn_masker_kernel(x_ref, w_ref, b_ref, mix_ref, out_ref):
    """One (tm, Out_p) output slab: full-K matmul + bias + relu + mask."""
    m_j = jnp.maximum(
        jnp.dot(x_ref[...], w_ref[...], preferred_element_type=jnp.float32)
        + b_ref[...],
        0.0,
    )
    out_ref[...] = (m_j * mix_ref[...]).astype(out_ref.dtype)


def _round_up(x, m):
    return ((x + m - 1) // m) * m


def _pick_tm(M, In, Out_p, budget_bytes=40 << 20):
    """Largest row tile (<=512, multiple of 8) whose VMEM footprint fits.

    Footprint estimate (f32): double-buffered x tile, double-buffered mix and
    out tiles, the resident weight counted twice for safety, plus the bias.
    ~40 MiB keeps us under v7x's 64 MiB physical VMEM with headroom; v5e/v6e
    have 128 MiB so they are never the binding constraint.
    """
    def vmem_need(t):
        return 4 * (2 * t * In + 4 * t * Out_p + 2 * In * Out_p + Out_p)

    tm = min(512, _round_up(M, 8))
    while tm > 8 and vmem_need(tm) > budget_bytes:
        tm = max(8, (tm // 2) // 8 * 8)
    return tm


@functools.partial(jax.jit, static_argnames=("context_length",))
def fnn_masker_forward(m_dec, mix_mg_sequence, weight_t, bias, context_length):
    """Pallas-backed FnnMasker forward.

    m_dec:            (B, T', In)
    mix_mg_sequence:  (B, T,  Out) with T = T' + 2*context_length
    weight_t:         (In, Out)   == torch linear weight transposed
    bias:             (Out,)
    """
    B, Tp, In = m_dec.shape
    _, T, Out = mix_mg_sequence.shape

    # Glue: context-crop + flatten (batch, time) -> rows.  Pure layout work,
    # fused by XLA with the padding below.
    mix_prime = jax.lax.slice_in_dim(
        mix_mg_sequence, context_length, T - context_length, axis=1
    )
    M = B * Tp
    x = m_dec.reshape(M, In)
    mix2 = mix_prime.reshape(M, Out)

    # Lane-dense / ragged-edge padding (all static at trace time):
    #   Out -> multiple of 128 (unmasked vector stores), M -> multiple of tm.
    Out_p = _round_up(Out, 128)
    tm = _pick_tm(M, In, Out_p)
    M_p = _round_up(M, tm)

    if M_p != M:
        x = jnp.pad(x, ((0, M_p - M), (0, 0)))
        mix2 = jnp.pad(mix2, ((0, M_p - M), (0, 0)))
    if Out_p != Out:
        mix2 = jnp.pad(mix2, ((0, 0), (0, Out_p - Out)))
        weight_t = jnp.pad(weight_t, ((0, 0), (0, Out_p - Out)))
        bias = jnp.pad(bias, (0, Out_p - Out))
    b2 = bias.reshape(1, Out_p)

    grid = (M_p // tm,)

    out = pl.pallas_call(
        _fnn_masker_kernel,
        out_shape=jax.ShapeDtypeStruct((M_p, Out_p), m_dec.dtype),
        grid_spec=pltpu.PrefetchScalarGridSpec(
            num_scalar_prefetch=0,
            grid=grid,
            in_specs=[
                pl.BlockSpec((tm, In), lambda i: (i, 0)),      # activations (streamed)
                pl.BlockSpec((In, Out_p), lambda i: (0, 0)),   # weight (VMEM-resident)
                pl.BlockSpec((1, Out_p), lambda i: (0, 0)),    # bias (VMEM-resident)
                pl.BlockSpec((tm, Out_p), lambda i: (i, 0)),   # mix_prime (streamed)
            ],
            out_specs=pl.BlockSpec((tm, Out_p), lambda i: (i, 0)),
        ),
        compiler_params=pltpu.CompilerParams(
            dimension_semantics=("parallel",),   # row tiles shard across TCs on v7x
            vmem_limit_bytes=48 << 20,           # above default scoped limit, below v7x physical
        ),
    )(x, weight_t, b2, mix2)

    out = out[:M, :Out]
    return out.reshape(B, Tp, Out)


def init_params(key, input_size, output_size):
    """Deterministic synthetic params matching nn.init.xavier_normal_ + zero bias."""
    std = (2.0 / (input_size + output_size)) ** 0.5
    w = std * jax.random.normal(key, (output_size, input_size), dtype=jnp.float32)
    b = jnp.zeros((output_size,), dtype=jnp.float32)
    return w, b


if __name__ == "__main__":
    # Small shapes consistent with the module's forward.  output_size is
    # deliberately NOT a multiple of 128 to exercise the lane-padding path.
    B = 2
    context_length = 2
    T_prime = 8
    T = T_prime + 2 * context_length        # 12
    input_size = 32
    output_size = 40

    key = jax.random.PRNGKey(0)
    k_w, k_x, k_mix = jax.random.split(key, 3)

    weight, bias = init_params(k_w, input_size, output_size)   # torch layout (Out, In)
    weight_t = weight.T                                        # (In, Out) for the kernel

    m_dec = jax.random.normal(k_x, (B, T_prime, input_size), dtype=jnp.float32)
    mix_mg = jax.random.uniform(k_mix, (B, T, output_size), dtype=jnp.float32)

    out = fnn_masker_forward(m_dec, mix_mg, weight_t, bias, context_length)
    out = jax.block_until_ready(out)

    # Pure-JAX reference check of the exact PyTorch semantics.
    mix_prime = mix_mg[:, context_length:-context_length, :]
    ref = jnp.maximum(jnp.einsum("btk,ok->bto", m_dec, weight) + bias, 0.0) * mix_prime
    assert out.shape == (B, T_prime, output_size)
    assert jnp.allclose(out, ref, atol=1e-5, rtol=1e-5)

    print("KERNEL_OK")
</pallas_src>

<mosaic_0001>
module attributes {stable_mosaic.version = 11 : i64} {
  func.func @_fnn_masker_kernel(%arg0: i32, %arg1: memref<16x32xf32, #tpu.memory_space<vmem>>, %arg2: memref<32x128xf32, #tpu.memory_space<vmem>>, %arg3: memref<1x128xf32, #tpu.memory_space<vmem>>, %arg4: memref<16x128xf32, #tpu.memory_space<vmem>>, %arg5: memref<16x128xf32, #tpu.memory_space<vmem>>) attributes {dimension_semantics = [#tpu.dimension_semantics<parallel>], iteration_bounds = array<i64: 1>, scalar_prefetch = 0 : i64, scratch_operands = 0 : i64, tpu.core_type = #tpu.core_type<tc>, window_params = [{transform_indices = @transform_0, window_bounds = array<i64: 16, 32>}, {pipeline_mode = #tpu.pipeline_mode<synchronous>, transform_indices = @transform_1, window_bounds = array<i64: 32, 128>}, {pipeline_mode = #tpu.pipeline_mode<synchronous>, transform_indices = @transform_2, window_bounds = array<i64: 1, 128>}, {transform_indices = @transform_3, window_bounds = array<i64: 16, 128>}, {transform_indices = @transform_4, window_bounds = array<i64: 16, 128>}]} {
    %c0 = arith.constant 0 : index
    %c0_0 = arith.constant 0 : index
    %0 = vector.load %arg1[%c0, %c0_0] : memref<16x32xf32, #tpu.memory_space<vmem>>, vector<16x32xf32>
    %c0_1 = arith.constant 0 : index
    %c0_2 = arith.constant 0 : index
    %1 = vector.load %arg2[%c0_1, %c0_2] : memref<32x128xf32, #tpu.memory_space<vmem>>, vector<32x128xf32>
    %cst = arith.constant dense<0.000000e+00> : vector<16x128xf32>
    %2 = tpu.matmul %0, %1, %cst {dimension_numbers = #tpu.dot_dimension_numbers<[1], [0], [0], [1], [0, 0, 1, 1], [], []>} : vector<16x32xf32>, vector<32x128xf32>, vector<16x128xf32> -> vector<16x128xf32>
    %c0_3 = arith.constant 0 : index
    %c0_4 = arith.constant 0 : index
    %3 = vector.load %arg3[%c0_3, %c0_4] : memref<1x128xf32, #tpu.memory_space<vmem>>, vector<1x128xf32>
    %4 = vector.broadcast %3 : vector<1x128xf32> to vector<16x128xf32>
    %5 = arith.addf %2, %4 : vector<16x128xf32>
    %cst_5 = arith.constant 0.000000e+00 : f32
    %6 = vector.broadcast %cst_5 : f32 to vector<16x128xf32>
    %7 = arith.maximumf %5, %6 : vector<16x128xf32>
    %c0_6 = arith.constant 0 : index
    %c0_7 = arith.constant 0 : index
    %8 = vector.load %arg4[%c0_6, %c0_7] : memref<16x128xf32, #tpu.memory_space<vmem>>, vector<16x128xf32>
    %9 = arith.mulf %7, %8 : vector<16x128xf32>
    %c0_8 = arith.constant 0 : index
    %c0_9 = arith.constant 0 : index
    %10 = vector.load %arg5[%c0_8, %c0_9] : memref<16x128xf32, #tpu.memory_space<vmem>>, vector<16x128xf32>
    tpu.vector_store %arg5[%c0_8, %c0_9], %9 {strides = array<i32>} : memref<16x128xf32, #tpu.memory_space<vmem>>, vector<16x128xf32>,
    return
  }
  func.func @transform_0(%arg0: i32) -> (i32, i32) {
    %c0_i32 = arith.constant 0 : i32
    %c0_i32_0 = arith.constant 0 : i32
    return %arg0, %c0_i32 : i32, i32
  }
  func.func @transform_1(%arg0: i32) -> (i32, i32) {
    %c0_i32 = arith.constant 0 : i32
    %c0_i32_0 = arith.constant 0 : i32
    %c0_i32_1 = arith.constant 0 : i32
    return %c0_i32, %c0_i32_0 : i32, i32
  }
  func.func @transform_2(%arg0: i32) -> (i32, i32) {
    %c0_i32 = arith.constant 0 : i32
    %c0_i32_0 = arith.constant 0 : i32
    %c0_i32_1 = arith.constant 0 : i32
    return %c0_i32, %c0_i32_0 : i32, i32
  }
  func.func @transform_3(%arg0: i32) -> (i32, i32) {
    %c0_i32 = arith.constant 0 : i32
    %c0_i32_0 = arith.constant 0 : i32
    return %arg0, %c0_i32 : i32, i32
  }
  func.func @transform_4(%arg0: i32) -> (i32, i32) {
    %c0_i32 = arith.constant 0 : i32
    %c0_i32_0 = arith.constant 0 : i32
    return %arg0, %c0_i32 : i32, i32
  }
}

</mosaic_0001>

<llo_original>
// kernel: fnn_masker_forward.1
$region0: #{fnn_masker_forward.1}
  #allocation0 [shape = 'u32[]', space=smem, size = 0x4, offset = 0x4, fixed_abs, tag = 'smem constant byte address 0x4 - core index']
  #allocation1 [shape = 'u32[144,128]{1,0:T(1,128)}', space=vmem, size = 0x12000, scoped, tag = 'internal scratch']
  %s0 = inlined_call_operand.vmem [shape: f32[16,32], index: 0, kind: input, shape index: {}]
  %s1 = inlined_call_operand.vmem [shape: f32[32,128], index: 1, kind: input, shape index: {}]
  %s2 = inlined_call_operand.vmem [shape: f32[1,128], index: 2, kind: input, shape index: {}]
  %s3 = inlined_call_operand.vmem [shape: f32[16,128], index: 3, kind: input, shape index: {}]
  %s4 = inlined_call_operand.vmem [shape: f32[16,128], index: 4, kind: output, shape index: {}]
  %s5 = sld [smem:[#allocation0]]
  $region26: #{fnn_masker_forward.1} parent=0
    _
  %s7 = ssub.s32 1, %s5
  %s8 = scalar_select 0, %s7, %s5
  // Predicated region
  $region2: #{fnn_masker_forward.1} parent=0 // pred_check
    _
  $region3: #{fnn_masker_forward.1} parent=0 // pred_check_branch
    %10 = sbr.rel (0) target = $region5
  $region4: #{fnn_masker_forward.1} parent=0 // pred_region
    _
  $region5: #{fnn_masker_forward.1} parent=0 // pred_fallthru
    _
  // Predicated region
  $region6: #{fnn_masker_forward.1} parent=0 // pred_check
    _
  $region7: #{fnn_masker_forward.1} parent=0 // pred_check_branch
    %12 = sbr.rel (0) target = $region9
  $region8: #{fnn_masker_forward.1} parent=0 // pred_region
    _
  $region9: #{fnn_masker_forward.1} parent=0 // pred_fallthru
    _
  // Predicated region
  $region10: #{fnn_masker_forward.1} parent=0 // pred_check
    _
  $region11: #{fnn_masker_forward.1} parent=0 // pred_check_branch
    %14 = sbr.rel (0) target = $region13
  $region12: #{fnn_masker_forward.1} parent=0 // pred_region
    _
  $region13: #{fnn_masker_forward.1} parent=0 // pred_fallthru
    _
  // Predicated region
  $region14: #{fnn_masker_forward.1} parent=0 // pred_check
    _
  $region15: #{fnn_masker_forward.1} parent=0 // pred_check_branch
    %16 = sbr.rel (0) target = $region17
  $region16: #{fnn_masker_forward.1} parent=0 // pred_region
    _
  $region17: #{fnn_masker_forward.1} parent=0 // pred_fallthru
    _
  %v17 = vld [vmem:[%s0] sm:$0xff]
  %v18 = vld [vmem:[%s0 + $0x8] sm:$0xff]
  %v19 = vld [vmem:[%s1] sm:$0xff]
  %v20 = vld [vmem:[%s1 + $0x8] sm:$0xff]
  %v21 = vld [vmem:[%s1 + $0x10] sm:$0xff]
  %v22 = vld [vmem:[%s1 + $0x18] sm:$0xff]
  %v23 = vld [vmem:[%s2] sm:$0x1]
  %v25 = vlaneseq
  %v26 = vshrl.u32 %v25, 7
  %v27 = vsub.s32 0, %v26
  %v28 = vrot.slane %v23, %v27
  %vm30 = vcmask 261120
  %v32 = vsel %vm30, %v17, 0
  %v35 = vsel %vm30, %v18, 0
  %37 = vmatprep.subr.mxu0 0.0
  %38 = vmatpush1.msra.mxu0 %v19
  %39 = vmatprep.subr.mxu0 0.0
  %40 = vmatpush1.msra.mxu0 %v20
  %41 = vmatprep.subr.mxu0 0.0
  %42 = vmatpush1.msra.mxu0 %v21
  %43 = vmatprep.subr.mxu0 0.0
  %44 = vmatpush1.msra.mxu0 %v22
  %45 = vmatprep.subr.mxu0 0.0
  %46 = vmatpush1.msra.mxu0 0.0
  %47 = vmatprep.subr.mxu0 0.0
  %48 = vmatpush1.msra.mxu0 0.0
  %49 = vmatprep.subr.mxu0 0.0
  %50 = vmatpush1.msra.mxu0 0.0
  %51 = vmatprep.subr.mxu0 0.0
  %52 = vmatpush1.msra.mxu0 0.0
  %53 = vmatprep.subr.mxu0 0.0
  %54 = vmatpush1.msra.mxu0 0.0
  %55 = vmatprep.subr.mxu0 0.0
  %56 = vmatpush1.msra.mxu0 0.0
  %57 = vmatprep.subr.mxu0 0.0
  %58 = vmatpush1.msra.mxu0 0.0
  %59 = vmatprep.subr.mxu0 0.0
  %60 = vmatpush1.msra.mxu0 0.0
  %61 = vmatprep.subr.mxu0 0.0
  %62 = vmatpush1.msra.mxu0 0.0
  %63 = vmatprep.subr.mxu0 0.0
  %64 = vmatpush1.msra.mxu0 0.0
  %65 = vmatprep.subr.mxu0 0.0
  %66 = vmatpush1.msra.mxu0 0.0
  %67 = vmatprep.subr.mxu0 0.0
  %68 = vmatpush1.msra.mxu0 0.0
  %69 = vmatprep.subr.mxu0 0.0
  %70 = vmatpush1.msra.mxu0 0.0
  %71 = vmatprep.subr.mxu0 0.0
  %72 = vmatpush1.msra.mxu0 0.0
  %73 = vmatprep.subr.mxu0 0.0
  %74 = vmatpush1.msra.mxu0 0.0
  %75 = vmatprep.subr.mxu0 0.0
  %76 = vmatpush1.msra.mxu0 0.0
  %77 = vmatprep.subr.mxu0 0.0
  %78 = vmatpush1.msra.mxu0 0.0
  %79 = vmatprep.subr.mxu0 0.0
  %80 = vmatpush1.msra.mxu0 0.0
  %81 = vmatprep.subr.mxu0 0.0
  %82 = vmatpush1.msra.mxu0 0.0
  %83 = vmatprep.subr.mxu0 0.0
  %84 = vmatpush1.msra.mxu0 0.0
  %85 = vmatprep.subr.mxu0 0.0
  %86 = vmatpush1.msra.mxu0 0.0
  %87 = vmatprep.subr.mxu0 0.0
  %88 = vmatpush1.msra.mxu0 0.0
  %89 = vmatprep.subr.mxu0 0.0
  %90 = vmatpush1.msra.mxu0 0.0
  %91 = vmatprep.subr.mxu0 0.0
  %92 = vmatpush1.msra.mxu0 0.0
  %93 = vmatprep.subr.mxu0 0.0
  %94 = vmatpush1.msra.mxu0 0.0
  %95 = vmatprep.subr.mxu0 0.0
  %96 = vmatpush1.msra.mxu0 0.0
  %97 = vmatprep.subr.mxu0 0.0
  %98 = vmatpush1.msra.mxu0 0.0
  %99 = vmatprep.subr.mxu0 0.0
  %100 = vmatpush1.msra.mxu0 0.0
  %101 = vmatprep.mubr.f32.mxu0 0.0
  %102 = vmatmul.mubr.f32.gmra.mrb[0].mxu0 %v32
  %v103 = vpop.f32.mrb[0].mxu0
  %v104 = vadd.f32 %v28, %v103
  %v105 = vpop.f32.mrb[0].mxu0
  %106 = vmatprep.mubr.f32.mxu0 0.0
  %107 = vmatmul.mubr.f32.gmra.mrb[0].mxu0 %v35
  %v108 = vpop.f32.mrb[0].mxu0
  %v109 = vadd.f32 %v28, %v108
  %v110 = vpop.f32.mrb[0].mxu0
  %111 = vdwg.mxu0
  %v112 = vmax.f32 %v104, 0.0
  %v113 = vmax.f32 %v109, 0.0
  %v114 = vld [vmem:[%s3] sm:$0xff]
  %v115 = vld [vmem:[%s3 + $0x8] sm:$0xff]
  %v116 = vmul.f32 %v112, %v114
  %v117 = vmul.f32 %v113, %v115
  %118 = vst [vmem:[%s4] sm:$0xff] %v116
  %119 = vst [vmem:[%s4 + $0x8] sm:$0xff] %v117
  // Predicated region
  $region18: #{fnn_masker_forward.1} parent=0 // pred_check
    _
  $region19: #{fnn_masker_forward.1} parent=0 // pred_check_branch
    %121 = sbr.rel (0) target = $region21
  $region20: #{fnn_masker_forward.1} parent=0 // pred_region
    _
  $region21: #{fnn_masker_forward.1} parent=0 // pred_fallthru
    _
  // Predicated region
  $region22: #{fnn_masker_forward.1} parent=0 // pred_check
    _
  $region23: #{fnn_masker_forward.1} parent=0 // pred_check_branch
    %123 = sbr.rel (0) target = $region25
  $region24: #{fnn_masker_forward.1} parent=0 // pred_region
    _
  $region25: #{fnn_masker_forward.1} parent=0 // pred_fallthru
    _

</llo_original>
